<compile_context>
chip_gen: v6e
topology: v6e:2x2x1
jax: 0.10.0
libtpu: 0.0.40
codegen_flags: <defaults>
</compile_context>

<pallas_src>
import jax
import jax.numpy as jnp
from jax import lax
from jax.experimental import pallas as pl
from jax.experimental.pallas import tpu as pltpu

HIDDEN = 5
INPUT_FEATURES = 4
OUTPUT_FEATURES = 1

_LANE = 128          # batch elements per lane-row of the (rows, 128) geometry
_ROW_CHUNK = 64      # rows (8192 batch elems) per inner-loop iteration
_MAX_ROWS = 512      # rows per grid step: 65536 batch elems ~ 1.25 MiB HBM/step
_TARGET_TILES = 4    # aim for >= 4 grid steps (v7x megacore + pipeline overlap)


def _round_up(a, m):
    return ((a + m - 1) // m) * m


def _mlp_kernel(x_ref, w1_ref, b1_ref, w2_ref, b2_ref, o_ref):
    # x_ref: (INPUT_FEATURES, R, 128) in VMEM -- batch on (sublane, lane).
    # w1/b1/w2/b2: whole parameter arrays in SMEM (31 scalars total).
    # o_ref: (R, 128) in VMEM.
    R = o_ref.shape[0]
    ch = _ROW_CHUNK if (R % _ROW_CHUNK == 0) else R
    n_chunks = R // ch

    # Fold sigmoid(u) = 0.5*tanh(0.5*u) + 0.5 into the parameters on the
    # scalar unit (negligible, once per grid step):
    #   y = (b2 + 0.5*sum_k w2[k]) + sum_k (0.5*w2[k]) * tanh(x @ (0.5*w1_k)
    #                                                         + 0.5*b1[k])
    w1h = [[w1_ref[i, k] * 0.5 for i in range(INPUT_FEATURES)]
           for k in range(HIDDEN)]
    b1h = [b1_ref[k] * 0.5 for k in range(HIDDEN)]
    w2h = [w2_ref[k, 0] * 0.5 for k in range(HIDDEN)]
    y0 = b2_ref[0]
    for k in range(HIDDEN):
        y0 = y0 + w2h[k]

    def chunk(c, carry):
        r0 = pl.multiple_of(c * ch, ch)
        rows = pl.ds(r0, ch)
        y = None
        for k in range(HIDDEN):
            # z = 0.5 * (x . w1[:,k] + b1[k])  -- bias folded into first FMA.
            z = b1h[k] + w1h[k][0] * x_ref[0, rows, :].astype(jnp.float32)
            for i in range(1, INPUT_FEATURES):
                z = z + w1h[k][i] * x_ref[i, rows, :].astype(jnp.float32)
            t = jnp.tanh(z)                       # EUP slot
            y = w2h[k] * t if y is None else y + w2h[k] * t
        o_ref[rows, :] = (y + y0).astype(o_ref.dtype)
        return carry

    if n_chunks == 1:
        chunk(0, 0)
    else:
        lax.fori_loop(0, n_chunks, chunk, 0)


def _pick_rows_per_tile(n_rows):
    if n_rows <= _ROW_CHUNK:
        return n_rows                      # single block == full array (legal)
    r = _round_up(pl.cdiv(n_rows, _TARGET_TILES), _ROW_CHUNK)
    return min(_MAX_ROWS, max(_ROW_CHUNK, r))


def net_forward_feature_major(x_fm, w1, b1, w2, b2, *, rows_per_tile=None):
    """Forward pass with feature-major input x_fm: (INPUT_FEATURES, B)."""
    B = x_fm.shape[1]
    dtype = x_fm.dtype
    b_pad = max(_LANE, _round_up(B, _LANE))
    n_rows = b_pad // _LANE

    if b_pad != B:  # only a tiny tail pad; skipped when B % 128 == 0
        x_fm = jnp.pad(x_fm, ((0, 0), (0, b_pad - B)))
    # Free (metadata-only) reshape: batch -> (rows, 128) so vregs are dense.
    x_3d = x_fm.reshape(INPUT_FEATURES, n_rows, _LANE)

    R = _pick_rows_per_tile(n_rows) if rows_per_tile is None else rows_per_tile
    n_tiles = pl.cdiv(n_rows, R)

    smem = pl.BlockSpec(memory_space=pltpu.MemorySpace.SMEM)
    out3 = pl.pallas_call(
        _mlp_kernel,
        out_shape=jax.ShapeDtypeStruct((n_rows, _LANE), dtype),
        grid=(n_tiles,),
        in_specs=[
            pl.BlockSpec((INPUT_FEATURES, R, _LANE), lambda i: (0, i, 0)),
            smem,  # w1 (IN, H)
            smem,  # b1 (H,)
            smem,  # w2 (H, OUT)
            smem,  # b2 (OUT,)
        ],
        out_specs=pl.BlockSpec((R, _LANE), lambda i: (i, 0)),
        compiler_params=pltpu.CompilerParams(
            dimension_semantics=("parallel",)),
    )(x_3d, w1, b1, w2, b2)

    return out3.reshape(b_pad)[:B].reshape(B, OUTPUT_FEATURES)


def net_forward(x, w1, b1, w2, b2, *, rows_per_tile=None):
    """Forward pass of Net.

    x:  (B, INPUT_FEATURES)
    w1: (INPUT_FEATURES, HIDDEN)   (PyTorch fc1.weight transposed)
    b1: (HIDDEN,)
    w2: (HIDDEN, OUTPUT_FEATURES)  (PyTorch fc2.weight transposed)
    b2: (OUTPUT_FEATURES,)
    returns (B, OUTPUT_FEATURES)
    """
    # Single layout pass to feature-major; callers that already hold
    # feature-major data should call net_forward_feature_major directly.
    return net_forward_feature_major(jnp.transpose(x), w1, b1, w2, b2,
                                     rows_per_tile=rows_per_tile)


def init_params(key):
    """Deterministic init mimicking PyTorch nn.Linear default (+/- 1/sqrt(fan_in))."""
    k1, k2, k3, k4 = jax.random.split(key, 4)
    bound1 = 1.0 / jnp.sqrt(float(INPUT_FEATURES))
    bound2 = 1.0 / jnp.sqrt(float(HIDDEN))
    w1 = jax.random.uniform(k1, (INPUT_FEATURES, HIDDEN), jnp.float32, -bound1, bound1)
    b1 = jax.random.uniform(k2, (HIDDEN,), jnp.float32, -bound1, bound1)
    w2 = jax.random.uniform(k3, (HIDDEN, OUTPUT_FEATURES), jnp.float32, -bound2, bound2)
    b2 = jax.random.uniform(k4, (OUTPUT_FEATURES,), jnp.float32, -bound2, bound2)
    return w1, b1, w2, b2


def _reference(x, w1, b1, w2, b2):
    return jax.nn.sigmoid(x @ w1 + b1) @ w2 + b2


if __name__ == "__main__":
    key = jax.random.PRNGKey(0)
    kp, k1, k2, k3 = jax.random.split(key, 4)
    w1, b1, w2, b2 = init_params(kp)

    # 1) Tiny batch: single tile, block == full array.
    x1 = jax.random.normal(k1, (8, INPUT_FEATURES), jnp.float32)
    o1 = net_forward(x1, w1, b1, w2, b2)
    jax.block_until_ready(o1)
    assert o1.shape == (8, OUTPUT_FEATURES)
    assert jnp.allclose(o1, _reference(x1, w1, b1, w2, b2), atol=1e-5, rtol=1e-5)

    # 2) Multi-tile grid (3 steps) with a partial last block + tail padding.
    x2 = jax.random.normal(k2, (2049, INPUT_FEATURES), jnp.float32)
    o2 = net_forward(x2, w1, b1, w2, b2, rows_per_tile=8)
    jax.block_until_ready(o2)
    assert o2.shape == (2049, OUTPUT_FEATURES)
    assert jnp.allclose(o2, _reference(x2, w1, b1, w2, b2), atol=1e-5, rtol=1e-5)

    # 3) Default tile picker (>= 4 parallel tiles) on a larger batch.
    x3 = jax.random.normal(k3, (32768, INPUT_FEATURES), jnp.float32)
    r3 = _reference(x3, w1, b1, w2, b2)
    o3 = net_forward(x3, w1, b1, w2, b2)
    jax.block_until_ready(o3)
    assert o3.shape == (32768, OUTPUT_FEATURES)
    assert jnp.allclose(o3, r3, atol=1e-5, rtol=1e-5)

    # 4) Same batch, bigger tiles -> exercises the multi-chunk inner fori_loop.
    o4 = net_forward(x3, w1, b1, w2, b2, rows_per_tile=128)
    jax.block_until_ready(o4)
    assert jnp.allclose(o4, r3, atol=1e-5, rtol=1e-5)

    print("KERNEL_OK")
</pallas_src>

<mosaic_0001>
module attributes {stable_mosaic.version = 11 : i64} {
  func.func @_mlp_kernel(%arg0: i32, %arg1: memref<4x1x128xf32, #tpu.memory_space<vmem>>, %arg2: memref<4x5xf32, #tpu.memory_space<smem>>, %arg3: memref<5xf32, #tpu.memory_space<smem>>, %arg4: memref<5x1xf32, #tpu.memory_space<smem>>, %arg5: memref<1xf32, #tpu.memory_space<smem>>, %arg6: memref<1x128xf32, #tpu.memory_space<vmem>>) attributes {dimension_semantics = [#tpu.dimension_semantics<parallel>], iteration_bounds = array<i64: 1>, scalar_prefetch = 0 : i64, scratch_operands = 0 : i64, tpu.core_type = #tpu.core_type<tc>, window_params = [{transform_indices = @transform_0, window_bounds = array<i64: 4, 1, 128>}, {transform_indices = @transform_1, window_bounds = array<i64: 4, 5>}, {transform_indices = @transform_2, window_bounds = array<i64: 5>}, {transform_indices = @transform_3, window_bounds = array<i64: 5, 1>}, {transform_indices = @transform_4, window_bounds = array<i64: 1>}, {transform_indices = @transform_5, window_bounds = array<i64: 1, 128>}]} {
    %c0 = arith.constant 0 : index
    %c0_0 = arith.constant 0 : index
    %0 = memref.load %arg2[%c0, %c0_0] : memref<4x5xf32, #tpu.memory_space<smem>>
    %cst = arith.constant 5.000000e-01 : f32
    %1 = arith.mulf %0, %cst : f32
    %c1 = arith.constant 1 : index
    %c0_1 = arith.constant 0 : index
    %2 = memref.load %arg2[%c1, %c0_1] : memref<4x5xf32, #tpu.memory_space<smem>>
    %cst_2 = arith.constant 5.000000e-01 : f32
    %3 = arith.mulf %2, %cst_2 : f32
    %c2 = arith.constant 2 : index
    %c0_3 = arith.constant 0 : index
    %4 = memref.load %arg2[%c2, %c0_3] : memref<4x5xf32, #tpu.memory_space<smem>>
    %cst_4 = arith.constant 5.000000e-01 : f32
    %5 = arith.mulf %4, %cst_4 : f32
    %c3 = arith.constant 3 : index
    %c0_5 = arith.constant 0 : index
    %6 = memref.load %arg2[%c3, %c0_5] : memref<4x5xf32, #tpu.memory_space<smem>>
    %cst_6 = arith.constant 5.000000e-01 : f32
    %7 = arith.mulf %6, %cst_6 : f32
    %c0_7 = arith.constant 0 : index
    %c1_8 = arith.constant 1 : index
    %8 = memref.load %arg2[%c0_7, %c1_8] : memref<4x5xf32, #tpu.memory_space<smem>>
    %cst_9 = arith.constant 5.000000e-01 : f32
    %9 = arith.mulf %8, %cst_9 : f32
    %c1_10 = arith.constant 1 : index
    %c1_11 = arith.constant 1 : index
    %10 = memref.load %arg2[%c1_10, %c1_11] : memref<4x5xf32, #tpu.memory_space<smem>>
    %cst_12 = arith.constant 5.000000e-01 : f32
    %11 = arith.mulf %10, %cst_12 : f32
    %c2_13 = arith.constant 2 : index
    %c1_14 = arith.constant 1 : index
    %12 = memref.load %arg2[%c2_13, %c1_14] : memref<4x5xf32, #tpu.memory_space<smem>>
    %cst_15 = arith.constant 5.000000e-01 : f32
    %13 = arith.mulf %12, %cst_15 : f32
    %c3_16 = arith.constant 3 : index
    %c1_17 = arith.constant 1 : index
    %14 = memref.load %arg2[%c3_16, %c1_17] : memref<4x5xf32, #tpu.memory_space<smem>>
    %cst_18 = arith.constant 5.000000e-01 : f32
    %15 = arith.mulf %14, %cst_18 : f32
    %c0_19 = arith.constant 0 : index
    %c2_20 = arith.constant 2 : index
    %16 = memref.load %arg2[%c0_19, %c2_20] : memref<4x5xf32, #tpu.memory_space<smem>>
    %cst_21 = arith.constant 5.000000e-01 : f32
    %17 = arith.mulf %16, %cst_21 : f32
    %c1_22 = arith.constant 1 : index
    %c2_23 = arith.constant 2 : index
    %18 = memref.load %arg2[%c1_22, %c2_23] : memref<4x5xf32, #tpu.memory_space<smem>>
    %cst_24 = arith.constant 5.000000e-01 : f32
    %19 = arith.mulf %18, %cst_24 : f32
    %c2_25 = arith.constant 2 : index
    %c2_26 = arith.constant 2 : index
    %20 = memref.load %arg2[%c2_25, %c2_26] : memref<4x5xf32, #tpu.memory_space<smem>>
    %cst_27 = arith.constant 5.000000e-01 : f32
    %21 = arith.mulf %20, %cst_27 : f32
    %c3_28 = arith.constant 3 : index
    %c2_29 = arith.constant 2 : index
    %22 = memref.load %arg2[%c3_28, %c2_29] : memref<4x5xf32, #tpu.memory_space<smem>>
    %cst_30 = arith.constant 5.000000e-01 : f32
    %23 = arith.mulf %22, %cst_30 : f32
    %c0_31 = arith.constant 0 : index
    %c3_32 = arith.constant 3 : index
    %24 = memref.load %arg2[%c0_31, %c3_32] : memref<4x5xf32, #tpu.memory_space<smem>>
    %cst_33 = arith.constant 5.000000e-01 : f32
    %25 = arith.mulf %24, %cst_33 : f32
    %c1_34 = arith.constant 1 : index
    %c3_35 = arith.constant 3 : index
    %26 = memref.load %arg2[%c1_34, %c3_35] : memref<4x5xf32, #tpu.memory_space<smem>>
    %cst_36 = arith.constant 5.000000e-01 : f32
    %27 = arith.mulf %26, %cst_36 : f32
    %c2_37 = arith.constant 2 : index
    %c3_38 = arith.constant 3 : index
    %28 = memref.load %arg2[%c2_37, %c3_38] : memref<4x5xf32, #tpu.memory_space<smem>>
    %cst_39 = arith.constant 5.000000e-01 : f32
    %29 = arith.mulf %28, %cst_39 : f32
    %c3_40 = arith.constant 3 : index
    %c3_41 = arith.constant 3 : index
    %30 = memref.load %arg2[%c3_40, %c3_41] : memref<4x5xf32, #tpu.memory_space<smem>>
    %cst_42 = arith.constant 5.000000e-01 : f32
    %31 = arith.mulf %30, %cst_42 : f32
    %c0_43 = arith.constant 0 : index
    %c4 = arith.constant 4 : index
    %32 = memref.load %arg2[%c0_43, %c4] : memref<4x5xf32, #tpu.memory_space<smem>>
    %cst_44 = arith.constant 5.000000e-01 : f32
    %33 = arith.mulf %32, %cst_44 : f32
    %c1_45 = arith.constant 1 : index
    %c4_46 = arith.constant 4 : index
    %34 = memref.load %arg2[%c1_45, %c4_46] : memref<4x5xf32, #tpu.memory_space<smem>>
    %cst_47 = arith.constant 5.000000e-01 : f32
    %35 = arith.mulf %34, %cst_47 : f32
    %c2_48 = arith.constant 2 : index
    %c4_49 = arith.constant 4 : index
    %36 = memref.load %arg2[%c2_48, %c4_49] : memref<4x5xf32, #tpu.memory_space<smem>>
    %cst_50 = arith.constant 5.000000e-01 : f32
    %37 = arith.mulf %36, %cst_50 : f32
    %c3_51 = arith.constant 3 : index
    %c4_52 = arith.constant 4 : index
    %38 = memref.load %arg2[%c3_51, %c4_52] : memref<4x5xf32, #tpu.memory_space<smem>>
    %cst_53 = arith.constant 5.000000e-01 : f32
    %39 = arith.mulf %38, %cst_53 : f32
    %c0_54 = arith.constant 0 : index
    %40 = memref.load %arg3[%c0_54] : memref<5xf32, #tpu.memory_space<smem>>
    %cst_55 = arith.constant 5.000000e-01 : f32
    %41 = arith.mulf %40, %cst_55 : f32
    %c1_56 = arith.constant 1 : index
    %42 = memref.load %arg3[%c1_56] : memref<5xf32, #tpu.memory_space<smem>>
    %cst_57 = arith.constant 5.000000e-01 : f32
    %43 = arith.mulf %42, %cst_57 : f32
    %c2_58 = arith.constant 2 : index
    %44 = memref.load %arg3[%c2_58] : memref<5xf32, #tpu.memory_space<smem>>
    %cst_59 = arith.constant 5.000000e-01 : f32
    %45 = arith.mulf %44, %cst_59 : f32
    %c3_60 = arith.constant 3 : index
    %46 = memref.load %arg3[%c3_60] : memref<5xf32, #tpu.memory_space<smem>>
    %cst_61 = arith.constant 5.000000e-01 : f32
    %47 = arith.mulf %46, %cst_61 : f32
    %c4_62 = arith.constant 4 : index
    %48 = memref.load %arg3[%c4_62] : memref<5xf32, #tpu.memory_space<smem>>
    %cst_63 = arith.constant 5.000000e-01 : f32
    %49 = arith.mulf %48, %cst_63 : f32
    %c0_64 = arith.constant 0 : index
    %c0_65 = arith.constant 0 : index
    %50 = memref.load %arg4[%c0_64, %c0_65] : memref<5x1xf32, #tpu.memory_space<smem>>
    %cst_66 = arith.constant 5.000000e-01 : f32
    %51 = arith.mulf %50, %cst_66 : f32
    %c1_67 = arith.constant 1 : index
    %c0_68 = arith.constant 0 : index
    %52 = memref.load %arg4[%c1_67, %c0_68] : memref<5x1xf32, #tpu.memory_space<smem>>
    %cst_69 = arith.constant 5.000000e-01 : f32
    %53 = arith.mulf %52, %cst_69 : f32
    %c2_70 = arith.constant 2 : index
    %c0_71 = arith.constant 0 : index
    %54 = memref.load %arg4[%c2_70, %c0_71] : memref<5x1xf32, #tpu.memory_space<smem>>
    %cst_72 = arith.constant 5.000000e-01 : f32
    %55 = arith.mulf %54, %cst_72 : f32
    %c3_73 = arith.constant 3 : index
    %c0_74 = arith.constant 0 : index
    %56 = memref.load %arg4[%c3_73, %c0_74] : memref<5x1xf32, #tpu.memory_space<smem>>
    %cst_75 = arith.constant 5.000000e-01 : f32
    %57 = arith.mulf %56, %cst_75 : f32
    %c4_76 = arith.constant 4 : index
    %c0_77 = arith.constant 0 : index
    %58 = memref.load %arg4[%c4_76, %c0_77] : memref<5x1xf32, #tpu.memory_space<smem>>
    %cst_78 = arith.constant 5.000000e-01 : f32
    %59 = arith.mulf %58, %cst_78 : f32
    %c0_79 = arith.constant 0 : index
    %60 = memref.load %arg5[%c0_79] : memref<1xf32, #tpu.memory_space<smem>>
    %61 = arith.addf %60, %51 : f32
    %62 = arith.addf %61, %53 : f32
    %63 = arith.addf %62, %55 : f32
    %64 = arith.addf %63, %57 : f32
    %65 = arith.addf %64, %59 : f32
    %c0_i32 = arith.constant 0 : i32
    %66 = tpu.assume_multiple %c0_i32, 1 : i32
    %c0_80 = arith.constant 0 : index
    %67 = arith.index_cast %66 : i32 to index
    %c0_81 = arith.constant 0 : index
    %68 = vector.load %arg1[%c0_80, %67, %c0_81] : memref<4x1x128xf32, #tpu.memory_space<vmem>>, vector<1x1x128xf32>
    %69 = vector.shape_cast %68 : vector<1x1x128xf32> to vector<1x128xf32>
    %70 = vector.broadcast %1 : f32 to vector<1x128xf32>
    %71 = arith.mulf %70, %69 : vector<1x128xf32>
    %72 = vector.broadcast %41 : f32 to vector<1x128xf32>
    %73 = arith.addf %72, %71 : vector<1x128xf32>
    %c1_82 = arith.constant 1 : index
    %74 = arith.index_cast %66 : i32 to index
    %c0_83 = arith.constant 0 : index
    %75 = vector.load %arg1[%c1_82, %74, %c0_83] : memref<4x1x128xf32, #tpu.memory_space<vmem>>, vector<1x1x128xf32>
    %76 = vector.shape_cast %75 : vector<1x1x128xf32> to vector<1x128xf32>
    %77 = vector.broadcast %3 : f32 to vector<1x128xf32>
    %78 = arith.mulf %77, %76 : vector<1x128xf32>
    %79 = arith.addf %73, %78 : vector<1x128xf32>
    %c2_84 = arith.constant 2 : index
    %80 = arith.index_cast %66 : i32 to index
    %c0_85 = arith.constant 0 : index
    %81 = vector.load %arg1[%c2_84, %80, %c0_85] : memref<4x1x128xf32, #tpu.memory_space<vmem>>, vector<1x1x128xf32>
    %82 = vector.shape_cast %81 : vector<1x1x128xf32> to vector<1x128xf32>
    %83 = vector.broadcast %5 : f32 to vector<1x128xf32>
    %84 = arith.mulf %83, %82 : vector<1x128xf32>
    %85 = arith.addf %79, %84 : vector<1x128xf32>
    %c3_86 = arith.constant 3 : index
    %86 = arith.index_cast %66 : i32 to index
    %c0_87 = arith.constant 0 : index
    %87 = vector.load %arg1[%c3_86, %86, %c0_87] : memref<4x1x128xf32, #tpu.memory_space<vmem>>, vector<1x1x128xf32>
    %88 = vector.shape_cast %87 : vector<1x1x128xf32> to vector<1x128xf32>
    %89 = vector.broadcast %7 : f32 to vector<1x128xf32>
    %90 = arith.mulf %89, %88 : vector<1x128xf32>
    %91 = arith.addf %85, %90 : vector<1x128xf32>
    %92 = math.tanh %91 : vector<1x128xf32>
    %93 = vector.broadcast %51 : f32 to vector<1x128xf32>
    %94 = arith.mulf %93, %92 : vector<1x128xf32>
    %c0_88 = arith.constant 0 : index
    %95 = arith.index_cast %66 : i32 to index
    %c0_89 = arith.constant 0 : index
    %96 = vector.load %arg1[%c0_88, %95, %c0_89] : memref<4x1x128xf32, #tpu.memory_space<vmem>>, vector<1x1x128xf32>
    %97 = vector.shape_cast %96 : vector<1x1x128xf32> to vector<1x128xf32>
    %98 = vector.broadcast %9 : f32 to vector<1x128xf32>
    %99 = arith.mulf %98, %97 : vector<1x128xf32>
    %100 = vector.broadcast %43 : f32 to vector<1x128xf32>
    %101 = arith.addf %100, %99 : vector<1x128xf32>
    %c1_90 = arith.constant 1 : index
    %102 = arith.index_cast %66 : i32 to index
    %c0_91 = arith.constant 0 : index
    %103 = vector.load %arg1[%c1_90, %102, %c0_91] : memref<4x1x128xf32, #tpu.memory_space<vmem>>, vector<1x1x128xf32>
    %104 = vector.shape_cast %103 : vector<1x1x128xf32> to vector<1x128xf32>
    %105 = vector.broadcast %11 : f32 to vector<1x128xf32>
    %106 = arith.mulf %105, %104 : vector<1x128xf32>
    %107 = arith.addf %101, %106 : vector<1x128xf32>
    %c2_92 = arith.constant 2 : index
    %108 = arith.index_cast %66 : i32 to index
    %c0_93 = arith.constant 0 : index
    %109 = vector.load %arg1[%c2_92, %108, %c0_93] : memref<4x1x128xf32, #tpu.memory_space<vmem>>, vector<1x1x128xf32>
    %110 = vector.shape_cast %109 : vector<1x1x128xf32> to vector<1x128xf32>
    %111 = vector.broadcast %13 : f32 to vector<1x128xf32>
    %112 = arith.mulf %111, %110 : vector<1x128xf32>
    %113 = arith.addf %107, %112 : vector<1x128xf32>
    %c3_94 = arith.constant 3 : index
    %114 = arith.index_cast %66 : i32 to index
    %c0_95 = arith.constant 0 : index
    %115 = vector.load %arg1[%c3_94, %114, %c0_95] : memref<4x1x128xf32, #tpu.memory_space<vmem>>, vector<1x1x128xf32>
    %116 = vector.shape_cast %115 : vector<1x1x128xf32> to vector<1x128xf32>
    %117 = vector.broadcast %15 : f32 to vector<1x128xf32>
    %118 = arith.mulf %117, %116 : vector<1x128xf32>
    %119 = arith.addf %113, %118 : vector<1x128xf32>
    %120 = math.tanh %119 : vector<1x128xf32>
    %121 = vector.broadcast %53 : f32 to vector<1x128xf32>
    %122 = arith.mulf %121, %120 : vector<1x128xf32>
    %123 = arith.addf %94, %122 : vector<1x128xf32>
    %c0_96 = arith.constant 0 : index
    %124 = arith.index_cast %66 : i32 to index
    %c0_97 = arith.constant 0 : index
    %125 = vector.load %arg1[%c0_96, %124, %c0_97] : memref<4x1x128xf32, #tpu.memory_space<vmem>>, vector<1x1x128xf32>
    %126 = vector.shape_cast %125 : vector<1x1x128xf32> to vector<1x128xf32>
    %127 = vector.broadcast %17 : f32 to vector<1x128xf32>
    %128 = arith.mulf %127, %126 : vector<1x128xf32>
    %129 = vector.broadcast %45 : f32 to vector<1x128xf32>
    %130 = arith.addf %129, %128 : vector<1x128xf32>
    %c1_98 = arith.constant 1 : index
    %131 = arith.index_cast %66 : i32 to index
    %c0_99 = arith.constant 0 : index
    %132 = vector.load %arg1[%c1_98, %131, %c0_99] : memref<4x1x128xf32, #tpu.memory_space<vmem>>, vector<1x1x128xf32>
    %133 = vector.shape_cast %132 : vector<1x1x128xf32> to vector<1x128xf32>
    %134 = vector.broadcast %19 : f32 to vector<1x128xf32>
    %135 = arith.mulf %134, %133 : vector<1x128xf32>
    %136 = arith.addf %130, %135 : vector<1x128xf32>
    %c2_100 = arith.constant 2 : index
    %137 = arith.index_cast %66 : i32 to index
    %c0_101 = arith.constant 0 : index
    %138 = vector.load %arg1[%c2_100, %137, %c0_101] : memref<4x1x128xf32, #tpu.memory_space<vmem>>, vector<1x1x128xf32>
    %139 = vector.shape_cast %138 : vector<1x1x128xf32> to vector<1x128xf32>
    %140 = vector.broadcast %21 : f32 to vector<1x128xf32>
    %141 = arith.mulf %140, %139 : vector<1x128xf32>
    %142 = arith.addf %136, %141 : vector<1x128xf32>
    %c3_102 = arith.constant 3 : index
    %143 = arith.index_cast %66 : i32 to index
    %c0_103 = arith.constant 0 : index
    %144 = vector.load %arg1[%c3_102, %143, %c0_103] : memref<4x1x128xf32, #tpu.memory_space<vmem>>, vector<1x1x128xf32>
    %145 = vector.shape_cast %144 : vector<1x1x128xf32> to vector<1x128xf32>
    %146 = vector.broadcast %23 : f32 to vector<1x128xf32>
    %147 = arith.mulf %146, %145 : vector<1x128xf32>
    %148 = arith.addf %142, %147 : vector<1x128xf32>
    %149 = math.tanh %148 : vector<1x128xf32>
    %150 = vector.broadcast %55 : f32 to vector<1x128xf32>
    %151 = arith.mulf %150, %149 : vector<1x128xf32>
    %152 = arith.addf %123, %151 : vector<1x128xf32>
    %c0_104 = arith.constant 0 : index
    %153 = arith.index_cast %66 : i32 to index
    %c0_105 = arith.constant 0 : index
    %154 = vector.load %arg1[%c0_104, %153, %c0_105] : memref<4x1x128xf32, #tpu.memory_space<vmem>>, vector<1x1x128xf32>
    %155 = vector.shape_cast %154 : vector<1x1x128xf32> to vector<1x128xf32>
    %156 = vector.broadcast %25 : f32 to vector<1x128xf32>
    %157 = arith.mulf %156, %155 : vector<1x128xf32>
    %158 = vector.broadcast %47 : f32 to vector<1x128xf32>
    %159 = arith.addf %158, %157 : vector<1x128xf32>
    %c1_106 = arith.constant 1 : index
    %160 = arith.index_cast %66 : i32 to index
    %c0_107 = arith.constant 0 : index
    %161 = vector.load %arg1[%c1_106, %160, %c0_107] : memref<4x1x128xf32, #tpu.memory_space<vmem>>, vector<1x1x128xf32>
    %162 = vector.shape_cast %161 : vector<1x1x128xf32> to vector<1x128xf32>
    %163 = vector.broadcast %27 : f32 to vector<1x128xf32>
    %164 = arith.mulf %163, %162 : vector<1x128xf32>
    %165 = arith.addf %159, %164 : vector<1x128xf32>
    %c2_108 = arith.constant 2 : index
    %166 = arith.index_cast %66 : i32 to index
    %c0_109 = arith.constant 0 : index
    %167 = vector.load %arg1[%c2_108, %166, %c0_109] : memref<4x1x128xf32, #tpu.memory_space<vmem>>, vector<1x1x128xf32>
    %168 = vector.shape_cast %167 : vector<1x1x128xf32> to vector<1x128xf32>
    %169 = vector.broadcast %29 : f32 to vector<1x128xf32>
    %170 = arith.mulf %169, %168 : vector<1x128xf32>
    %171 = arith.addf %165, %170 : vector<1x128xf32>
    %c3_110 = arith.constant 3 : index
    %172 = arith.index_cast %66 : i32 to index
    %c0_111 = arith.constant 0 : index
    %173 = vector.load %arg1[%c3_110, %172, %c0_111] : memref<4x1x128xf32, #tpu.memory_space<vmem>>, vector<1x1x128xf32>
    %174 = vector.shape_cast %173 : vector<1x1x128xf32> to vector<1x128xf32>
    %175 = vector.broadcast %31 : f32 to vector<1x128xf32>
    %176 = arith.mulf %175, %174 : vector<1x128xf32>
    %177 = arith.addf %171, %176 : vector<1x128xf32>
    %178 = math.tanh %177 : vector<1x128xf32>
    %179 = vector.broadcast %57 : f32 to vector<1x128xf32>
    %180 = arith.mulf %179, %178 : vector<1x128xf32>
    %181 = arith.addf %152, %180 : vector<1x128xf32>
    %c0_112 = arith.constant 0 : index
    %182 = arith.index_cast %66 : i32 to index
    %c0_113 = arith.constant 0 : index
    %183 = vector.load %arg1[%c0_112, %182, %c0_113] : memref<4x1x128xf32, #tpu.memory_space<vmem>>, vector<1x1x128xf32>
    %184 = vector.shape_cast %183 : vector<1x1x128xf32> to vector<1x128xf32>
    %185 = vector.broadcast %33 : f32 to vector<1x128xf32>
    %186 = arith.mulf %185, %184 : vector<1x128xf32>
    %187 = vector.broadcast %49 : f32 to vector<1x128xf32>
    %188 = arith.addf %187, %186 : vector<1x128xf32>
    %c1_114 = arith.constant 1 : index
    %189 = arith.index_cast %66 : i32 to index
    %c0_115 = arith.constant 0 : index
    %190 = vector.load %arg1[%c1_114, %189, %c0_115] : memref<4x1x128xf32, #tpu.memory_space<vmem>>, vector<1x1x128xf32>
    %191 = vector.shape_cast %190 : vector<1x1x128xf32> to vector<1x128xf32>
    %192 = vector.broadcast %35 : f32 to vector<1x128xf32>
    %193 = arith.mulf %192, %191 : vector<1x128xf32>
    %194 = arith.addf %188, %193 : vector<1x128xf32>
    %c2_116 = arith.constant 2 : index
    %195 = arith.index_cast %66 : i32 to index
    %c0_117 = arith.constant 0 : index
    %196 = vector.load %arg1[%c2_116, %195, %c0_117] : memref<4x1x128xf32, #tpu.memory_space<vmem>>, vector<1x1x128xf32>
    %197 = vector.shape_cast %196 : vector<1x1x128xf32> to vector<1x128xf32>
    %198 = vector.broadcast %37 : f32 to vector<1x128xf32>
    %199 = arith.mulf %198, %197 : vector<1x128xf32>
    %200 = arith.addf %194, %199 : vector<1x128xf32>
    %c3_118 = arith.constant 3 : index
    %201 = arith.index_cast %66 : i32 to index
    %c0_119 = arith.constant 0 : index
    %202 = vector.load %arg1[%c3_118, %201, %c0_119] : memref<4x1x128xf32, #tpu.memory_space<vmem>>, vector<1x1x128xf32>
    %203 = vector.shape_cast %202 : vector<1x1x128xf32> to vector<1x128xf32>
    %204 = vector.broadcast %39 : f32 to vector<1x128xf32>
    %205 = arith.mulf %204, %203 : vector<1x128xf32>
    %206 = arith.addf %200, %205 : vector<1x128xf32>
    %207 = math.tanh %206 : vector<1x128xf32>
    %208 = vector.broadcast %59 : f32 to vector<1x128xf32>
    %209 = arith.mulf %208, %207 : vector<1x128xf32>
    %210 = arith.addf %181, %209 : vector<1x128xf32>
    %211 = vector.broadcast %65 : f32 to vector<1x128xf32>
    %212 = arith.addf %210, %211 : vector<1x128xf32>
    %213 = arith.index_cast %66 : i32 to index
    %c0_120 = arith.constant 0 : index
    %214 = vector.load %arg6[%213, %c0_120] : memref<1x128xf32, #tpu.memory_space<vmem>>, vector<1x128xf32>
    tpu.vector_store %arg6[%213, %c0_120], %212 {strides = array<i32>} : memref<1x128xf32, #tpu.memory_space<vmem>>, vector<1x128xf32>,
    return
  }
  func.func @transform_0(%arg0: i32) -> (i32, i32, i32) {
    %c0_i32 = arith.constant 0 : i32
    %c0_i32_0 = arith.constant 0 : i32
    %c0_i32_1 = arith.constant 0 : i32
    return %c0_i32, %arg0, %c0_i32_0 : i32, i32, i32
  }
  func.func @transform_1(%arg0: i32) -> (i32, i32) {
    %c0_i32 = arith.constant 0 : i32
    %c0_i32_0 = arith.constant 0 : i32
    %c0_i32_1 = arith.constant 0 : i32
    return %c0_i32, %c0_i32_0 : i32, i32
  }
  func.func @transform_2(%arg0: i32) -> i32 {
    %c0_i32 = arith.constant 0 : i32
    %c0_i32_0 = arith.constant 0 : i32
    return %c0_i32 : i32
  }
  func.func @transform_3(%arg0: i32) -> (i32, i32) {
    %c0_i32 = arith.constant 0 : i32
    %c0_i32_0 = arith.constant 0 : i32
    %c0_i32_1 = arith.constant 0 : i32
    return %c0_i32, %c0_i32_0 : i32, i32
  }
  func.func @transform_4(%arg0: i32) -> i32 {
    %c0_i32 = arith.constant 0 : i32
    %c0_i32_0 = arith.constant 0 : i32
    return %c0_i32 : i32
  }
  func.func @transform_5(%arg0: i32) -> (i32, i32) {
    %c0_i32 = arith.constant 0 : i32
    %c0_i32_0 = arith.constant 0 : i32
    return %arg0, %c0_i32 : i32, i32
  }
}

</mosaic_0001>

<llo_original>
// kernel: tpu_custom_call.1
$region0: #{tpu_custom_call.1}
  #allocation0 [shape = 'u32[]', space=smem, size = 0x4, offset = 0x4, fixed_abs, tag = 'smem constant byte address 0x4 - core index']
  #allocation1 [shape = 'u32[144,128]{1,0:T(1,128)}', space=vmem, size = 0x12000, scoped, tag = 'internal scratch']
  #allocation2 [shape = 'f32[1]{0:T(128)S(6)}', space=smem, size = 0x200, scoped, tag = 'scoped memory for tpu_custom_call.1']
  %s0 = inlined_call_operand.vmem [shape: f32[4,1,128], index: 0, kind: input, shape index: {}]
  %s1 = inlined_call_operand.vmem [shape: f32[4,5], index: 1, kind: input, shape index: {}]
  %s2 = inlined_call_operand.vmem [shape: f32[5], index: 2, kind: input, shape index: {}]
  %s3 = inlined_call_operand.vmem [shape: f32[5,1], index: 3, kind: input, shape index: {}]
  %s4 = inlined_call_operand.<no memory space> [shape: f32[1], index: 4, kind: input, shape index: {}]
  %s5 = inlined_call_operand.hbm [shape: f32[1,128], index: 5, kind: output, shape index: {}]
  %s6 = sld [smem:[#allocation0]]
  $region42: #{tpu_custom_call.1} parent=0
    _
  %s8 = ssub.s32 1, %s6
  %s9 = scalar_select 0, %s8, %s6
  %10 = sst [smem:[#allocation2]] %s4
  $region1: #{tpu_custom_call.1} parent=0
    #allocation3 [shape = 'u8[2048]{0}', space=smem, size = 0x800, scoped, tag = 'input window, operand 1, single buffered']
    #allocation4 [shape = 's32[1]{0}', space=sflag, size = 0x4, scoped, tag = 'scoped memory for tpu_custom_call.1']
    #allocation5 [shape = 's32[1]{0}', space=sflag, size = 0x4, scoped, tag = 'scoped memory for tpu_custom_call.1']
    #allocation6 [shape = 'u8[512]{0}', space=smem, size = 0x200, scoped, tag = 'input window, operand 2, single buffered']
    #allocation7 [shape = 's32[1]{0}', space=sflag, size = 0x4, scoped, tag = 'scoped memory for tpu_custom_call.1']
    #allocation8 [shape = 'u8[4096]{0}', space=smem, size = 0x1000, scoped, tag = 'input window, operand 3, single buffered']
    #allocation9 [shape = 'u8[512]{0}', space=vmem, size = 0x400, scoped, tag = 'output window, operand 0, single buffered']
    %11 = vsyncpa [#allocation5], 0
    %12 = vsyncpa [#allocation7], 0
    %13 = vsyncpa [#allocation4], 0
    // Predicated region
    $region2: #{tpu_custom_call.1} parent=1 // pred_check
      _
    $region3: #{tpu_custom_call.1} parent=1 // pred_check_branch
      %15 = sbr.rel (0) target = $region5
    $region4: #{tpu_custom_call.1} parent=1 // pred_region
      _
    $region5: #{tpu_custom_call.1} parent=1 // pred_fallthru
      _
    // Predicated region
    $region6: #{tpu_custom_call.1} parent=1 // pred_check
      _
    $region7: #{tpu_custom_call.1} parent=1 // pred_check_branch
      %17 = sbr.rel (0) target = $region9
    $region8: #{tpu_custom_call.1} parent=1 // pred_region
      %s19 = ssub.s32 64, 64
      %20 = vsyncadd [#allocation5], %s19
      %s22 = sshll.u32 %s1, 4
      %s23 = int_to_ptr.vmem [resolvable:$true] %s22
      %25 = dma.vmem_to_smem %s23, 64, [#allocation3], [#allocation5]
    $region9: #{tpu_custom_call.1} parent=1 // pred_fallthru
      _
    // Predicated region
    $region10: #{tpu_custom_call.1} parent=1 // pred_check
      _
    $region11: #{tpu_custom_call.1} parent=1 // pred_check_branch
      %27 = sbr.rel (0) target = $region13
    $region12: #{tpu_custom_call.1} parent=1 // pred_region
      %s29 = ssub.s32 16, 16
      %30 = vsyncadd [#allocation7], %s29
      %s32 = sshll.u32 %s2, 4
      %s33 = int_to_ptr.vmem [resolvable:$true] %s32
      %35 = dma.vmem_to_smem %s33, 16, [#allocation6], [#allocation7]
    $region13: #{tpu_custom_call.1} parent=1 // pred_fallthru
      _
    // Predicated region
    $region14: #{tpu_custom_call.1} parent=1 // pred_check
      _
    $region15: #{tpu_custom_call.1} parent=1 // pred_check_branch
      %37 = sbr.rel (0) target = $region17
    $region16: #{tpu_custom_call.1} parent=1 // pred_region
      %s39 = ssub.s32 128, 128
      %40 = vsyncadd [#allocation7], %s39
      %s42 = sshll.u32 %s3, 4
      %s43 = int_to_ptr.vmem [resolvable:$true] %s42
      %45 = dma.vmem_to_smem %s43, 128, [#allocation8], [#allocation7]
    $region17: #{tpu_custom_call.1} parent=1 // pred_fallthru
      _
    // Predicated region
    $region18: #{tpu_custom_call.1} parent=1 // pred_check
      _
    $region19: #{tpu_custom_call.1} parent=1 // pred_check_branch
      %47 = sbr.rel (0) target = $region21
    $region20: #{tpu_custom_call.1} parent=1 // pred_region
      _
    $region21: #{tpu_custom_call.1} parent=1 // pred_fallthru
      _
    // Predicated region
    $region22: #{tpu_custom_call.1} parent=1 // pred_check
      _
    $region23: #{tpu_custom_call.1} parent=1 // pred_check_branch
      %49 = sbr.rel (0) target = $region25
    $region24: #{tpu_custom_call.1} parent=1 // pred_region
      %50 = dma.done [#allocation5], 64
    $region25: #{tpu_custom_call.1} parent=1 // pred_fallthru
      _
    // Predicated region
    $region26: #{tpu_custom_call.1} parent=1 // pred_check
      _
    $region27: #{tpu_custom_call.1} parent=1 // pred_check_branch
      %52 = sbr.rel (0) target = $region29
    $region28: #{tpu_custom_call.1} parent=1 // pred_region
      %53 = dma.done [#allocation7], 16
    $region29: #{tpu_custom_call.1} parent=1 // pred_fallthru
      _
    // Predicated region
    $region30: #{tpu_custom_call.1} parent=1 // pred_check
      _
    $region31: #{tpu_custom_call.1} parent=1 // pred_check_branch
      %55 = sbr.rel (0) target = $region33
    $region32: #{tpu_custom_call.1} parent=1 // pred_region
      %56 = dma.done [#allocation7], 128
    $region33: #{tpu_custom_call.1} parent=1 // pred_fallthru
      _
    %57 = sfence
    %s58 = sld [smem:[#allocation3]]
    %s59 = smul.f32 %s58, 0.5
    %s60 = sld [smem:[#allocation3 + $0x80]]
    %s61 = smul.f32 %s60, 0.5
    %s62 = sld [smem:[#allocation3 + $0x100]]
    %s63 = smul.f32 %s62, 0.5
    %s64 = sld [smem:[#allocation3 + $0x180]]
    %s65 = smul.f32 %s64, 0.5
    %s66 = sld [smem:[#allocation3 + $0x1]]
    %s67 = smul.f32 %s66, 0.5
    %s68 = sld [smem:[#allocation3 + $0x81]]
    %s69 = smul.f32 %s68, 0.5
    %s70 = sld [smem:[#allocation3 + $0x101]]
    %s71 = smul.f32 %s70, 0.5
    %s72 = sld [smem:[#allocation3 + $0x181]]
    %s73 = smul.f32 %s72, 0.5
    %s74 = sld [smem:[#allocation3 + $0x2]]
    %s75 = smul.f32 %s74, 0.5
    %s76 = sld [smem:[#allocation3 + $0x82]]
    %s77 = smul.f32 %s76, 0.5
    %s78 = sld [smem:[#allocation3 + $0x102]]
    %s79 = smul.f32 %s78, 0.5
    %s80 = sld [smem:[#allocation3 + $0x182]]
    %s81 = smul.f32 %s80, 0.5
    %s82 = sld [smem:[#allocation3 + $0x3]]
    %s83 = smul.f32 %s82, 0.5
    %s84 = sld [smem:[#allocation3 + $0x83]]
    %s85 = smul.f32 %s84, 0.5
    %s86 = sld [smem:[#allocation3 + $0x103]]
    %s87 = smul.f32 %s86, 0.5
    %s88 = sld [smem:[#allocation3 + $0x183]]
    %s89 = smul.f32 %s88, 0.5
    %s90 = sld [smem:[#allocation3 + $0x4]]
    %s91 = smul.f32 %s90, 0.5
    %s92 = sld [smem:[#allocation3 + $0x84]]
    %s93 = smul.f32 %s92, 0.5
    %s94 = sld [smem:[#allocation3 + $0x104]]
    %s95 = smul.f32 %s94, 0.5
    %s96 = sld [smem:[#allocation3 + $0x184]]
    %s97 = smul.f32 %s96, 0.5
    %s98 = sld [smem:[#allocation6]]
    %s99 = smul.f32 %s98, 0.5
    %s100 = sld [smem:[#allocation6 + $0x1]]
    %s101 = smul.f32 %s100, 0.5
    %s102 = sld [smem:[#allocation6 + $0x2]]
    %s103 = smul.f32 %s102, 0.5
    %s104 = sld [smem:[#allocation6 + $0x3]]
    %s105 = smul.f32 %s104, 0.5
    %s106 = sld [smem:[#allocation6 + $0x4]]
    %s107 = smul.f32 %s106, 0.5
    %s108 = sld [smem:[#allocation8]]
    %s109 = smul.f32 %s108, 0.5
    %s110 = sld [smem:[#allocation8 + $0x80]]
    %s111 = smul.f32 %s110, 0.5
    %s112 = sld [smem:[#allocation8 + $0x100]]
    %s113 = smul.f32 %s112, 0.5
    %s114 = sld [smem:[#allocation8 + $0x180]]
    %s115 = smul.f32 %s114, 0.5
    %s116 = sld [smem:[#allocation8 + $0x200]]
    %s117 = smul.f32 %s116, 0.5
    %s118 = sld [smem:[#allocation2]]
    %s119 = sadd.f32 %s118, %s109
    %s120 = sadd.f32 %s119, %s111
    %s121 = sadd.f32 %s120, %s113
    %s122 = sadd.f32 %s121, %s115
    %s123 = sadd.f32 %s122, %s117
    %v124 = vld [vmem:[%s0] sm:$0x1]
    %v125 = vstv %s59
    %v126 = vmul.f32 %v125, %v124
    %v127 = vstv %s99
    %v128 = vadd.f32 %v127, %v126
    %s129 = sadd.s32 0, 1
    %s130 = scalar_lea.vmem %s0, %s129
    %v131 = vld [vmem:[%s130] sm:$0x1]
    %v132 = vstv %s61
    %v133 = vmul.f32 %v132, %v131
    %v134 = vadd.f32 %v128, %v133
    %s135 = sadd.s32 0, 2
    %s136 = scalar_lea.vmem %s0, %s135
    %v137 = vld [vmem:[%s136] sm:$0x1]
    %v138 = vstv %s63
    %v139 = vmul.f32 %v138, %v137
    %v140 = vadd.f32 %v134, %v139
    %s141 = sadd.s32 0, 3
    %s142 = scalar_lea.vmem %s0, %s141
    %v143 = vld [vmem:[%s142] sm:$0x1]
    %v144 = vstv %s65
    %v145 = vmul.f32 %v144, %v143
    %v146 = vadd.f32 %v140, %v145
    %v147 = vtanh.pop %v146
    %v148 = vstv %s109
    %v149 = vmul.f32 %v148, %v147
    %v150 = vstv %s67
    %v151 = vmul.f32 %v150, %v124
    %v152 = vstv %s101
    %v153 = vadd.f32 %v152, %v151
    %v154 = vstv %s69
    %v155 = vmul.f32 %v154, %v131
    %v156 = vadd.f32 %v153, %v155
    %v157 = vstv %s71
    %v158 = vmul.f32 %v157, %v137
    %v159 = vadd.f32 %v156, %v158
    %v160 = vstv %s73
    %v161 = vmul.f32 %v160, %v143
    %v162 = vadd.f32 %v159, %v161
    %v163 = vtanh.pop %v162
    %v164 = vstv %s111
    %v165 = vmul.f32 %v164, %v163
    %v166 = vadd.f32 %v149, %v165
    %v167 = vstv %s75
    %v168 = vmul.f32 %v167, %v124
    %v169 = vstv %s103
    %v170 = vadd.f32 %v169, %v168
    %v171 = vstv %s77
    %v172 = vmul.f32 %v171, %v131
    %v173 = vadd.f32 %v170, %v172
    %v174 = vstv %s79
    %v175 = vmul.f32 %v174, %v137
    %v176 = vadd.f32 %v173, %v175
    %v177 = vstv %s81
    %v178 = vmul.f32 %v177, %v143
    %v179 = vadd.f32 %v176, %v178
    %v180 = vtanh.pop %v179
    %v181 = vstv %s113
    %v182 = vmul.f32 %v181, %v180
    %v183 = vadd.f32 %v166, %v182
    %v184 = vstv %s83
    %v185 = vmul.f32 %v184, %v124
    %v186 = vstv %s105
    %v187 = vadd.f32 %v186, %v185
    %v188 = vstv %s85
    %v189 = vmul.f32 %v188, %v131
    %v190 = vadd.f32 %v187, %v189
    %v191 = vstv %s87
    %v192 = vmul.f32 %v191, %v137
    %v193 = vadd.f32 %v190, %v192
    %v194 = vstv %s89
    %v195 = vmul.f32 %v194, %v143
    %v196 = vadd.f32 %v193, %v195
    %v197 = vtanh.pop %v196
    %v198 = vstv %s115
    %v199 = vmul.f32 %v198, %v197
    %v200 = vadd.f32 %v183, %v199
    %v201 = vstv %s91
    %v202 = vmul.f32 %v201, %v124
    %v203 = vstv %s107
    %v204 = vadd.f32 %v203, %v202
    %v205 = vstv %s93
    %v206 = vmul.f32 %v205, %v131
    %v207 = vadd.f32 %v204, %v206
    %v208 = vstv %s95
    %v209 = vmul.f32 %v208, %v137
    %v210 = vadd.f32 %v207, %v209
    %v211 = vstv %s97
    %v212 = vmul.f32 %v211, %v143
    %v213 = vadd.f32 %v210, %v212
    %v214 = vtanh.pop %v213
    %v215 = vstv %s117
    %v216 = vmul.f32 %v215, %v214
    %v217 = vadd.f32 %v200, %v216
    %v218 = vstv %s123
    %v219 = vadd.f32 %v217, %v218
    %220 = vst [vmem:[#allocation9] sm:$0x1] %v219
    // Predicated region
    $region34: #{tpu_custom_call.1} parent=1 // pred_check
      _
    $region35: #{tpu_custom_call.1} parent=1 // pred_check_branch
      %222 = sbr.rel (0) target = $region37
    $region36: #{tpu_custom_call.1} parent=1 // pred_region
      %s224 = ssub.s32 16, 16
      %225 = vsyncadd [#allocation4], %s224
      %s227 = sshll.u32 [#allocation9], 4
      %s228 = int_to_ptr.vmem [resolvable:$true] %s227
      %230 = dma.vmem_to_hbm [thread:$0]  %s228, 16, %s5, [#allocation4]
    $region37: #{tpu_custom_call.1} parent=1 // pred_fallthru
      _
    // Predicated region
    $region38: #{tpu_custom_call.1} parent=1 // pred_check
      _
    $region39: #{tpu_custom_call.1} parent=1 // pred_check_branch
      %232 = sbr.rel (0) target = $region41
    $region40: #{tpu_custom_call.1} parent=1 // pred_region
      %233 = dma.done [#allocation4], 16
    $region41: #{tpu_custom_call.1} parent=1 // pred_fallthru
      _
    %234 = vsyncpa [#allocation4], 1
    %235 = vsyncpa [#allocation5], 1
    %236 = vsyncpa [#allocation7], 1

</llo_original>
